<compile_context>
chip_gen: v7x
topology: tpu7x:2x2x1
jax: 0.10.0
libtpu: 0.0.40
codegen_flags: <defaults>
</compile_context>

<pallas_src>
import functools
import math

import jax
import jax.numpy as jnp
from jax.experimental import pallas as pl
from jax.experimental.pallas import tpu as pltpu


def _round_up(x, m):
    return (x + m - 1) // m * m


def timestep_embedder_kernel(t_ref, scale_ref, shift_ref,
                             w1_ref, b1_ref, w2_ref, b2_ref, out_ref):
    # --- MPFourier: cos(outer(t, scale) + shift); sqrt(2) folded into W1 ---
    theta = t_ref[...] * scale_ref[...] + shift_ref[...]          # (TB, F) f32
    fourier = jnp.cos(theta).astype(jnp.bfloat16)                 # MXU-native LHS

    # --- MLP: Linear(F->H) -> SiLU -> Linear(H->H) ---
    h = jnp.dot(fourier, w1_ref[...], preferred_element_type=jnp.float32)
    h = h + b1_ref[...]                                           # (TB, H) f32
    h = h * jax.nn.sigmoid(h)                                     # SiLU (VPU + EUP)
    out = jnp.dot(h.astype(jnp.bfloat16), w2_ref[...],
                  preferred_element_type=jnp.float32)
    out_ref[...] = (out + b2_ref[...]).astype(out_ref.dtype)


def prepare_params(scale, shift, w1, b1, w2, b2):
    """One-time parameter prep (do at init, not per call)."""
    F = scale.shape[0]
    H = w2.shape[1]
    return dict(
        scale=scale.astype(jnp.float32).reshape(1, F),
        shift=shift.astype(jnp.float32).reshape(1, F),
        # fold MPFourier's sqrt(2) into W1; bf16 weights halve HBM traffic.
        w1=(math.sqrt(2.0) * w1.astype(jnp.float32)).astype(jnp.bfloat16),
        b1=b1.astype(jnp.float32).reshape(1, H),
        w2=w2.astype(jnp.bfloat16),
        b2=b2.astype(jnp.float32).reshape(1, H),
    )


@functools.partial(jax.jit, static_argnames=("block_b",))
def timestep_embedder(t, params, *, block_b=256):
    """t: (B,) f32 scalar timesteps -> (B, H) f32 embeddings."""
    B = t.shape[0]
    F = params["scale"].shape[1]
    H = params["w2"].shape[1]

    # Batch tile: multiple of 8 (f32 sublane), capped at block_b rows.
    tb = min(block_b, _round_up(B, 8))
    b_pad = _round_up(B, tb)
    t2 = jnp.zeros((b_pad, 1), jnp.float32).at[:B, 0].set(t.astype(jnp.float32))

    const = lambda i: (0, 0)  # weights/buffers: VMEM-resident, DMA'd once

    flops = 2 * b_pad * (F * H + H * H)
    transcendentals = b_pad * (F + H)                 # cos + sigmoid exp
    bytes_accessed = (4 * b_pad * (1 + H)             # t in, out (f32)
                      + 2 * (F * H + H * H)           # bf16 weights
                      + 4 * (2 * F + 2 * H))          # scale/shift/biases (f32)

    out = pl.pallas_call(
        timestep_embedder_kernel,
        out_shape=jax.ShapeDtypeStruct((b_pad, H), jnp.float32),
        grid_spec=pltpu.PrefetchScalarGridSpec(
            num_scalar_prefetch=0,
            grid=(b_pad // tb,),
            in_specs=[
                pl.BlockSpec((tb, 1), lambda i: (i, 0)),   # t
                pl.BlockSpec((1, F), const),               # scale
                pl.BlockSpec((1, F), const),               # shift
                pl.BlockSpec((F, H), const),               # w1 (bf16, sqrt2-folded)
                pl.BlockSpec((1, H), const),               # b1
                pl.BlockSpec((H, H), const),               # w2 (bf16)
                pl.BlockSpec((1, H), const),               # b2
            ],
            out_specs=pl.BlockSpec((tb, H), lambda i: (i, 0)),
        ),
        compiler_params=pltpu.CompilerParams(
            dimension_semantics=("parallel",)),
        cost_estimate=pl.CostEstimate(
            flops=flops, transcendentals=transcendentals,
            bytes_accessed=bytes_accessed),
    )(t2, params["scale"], params["shift"],
      params["w1"], params["b1"], params["w2"], params["b2"])
    return out[:B]


def reference_f32(t, scale, shift, w1, b1, w2, b2):
    """True-f32 reference (HIGHEST matmul precision)."""
    dot = functools.partial(jnp.dot, precision=jax.lax.Precision.HIGHEST,
                            preferred_element_type=jnp.float32)
    fourier = math.sqrt(2.0) * jnp.cos(jnp.outer(t, scale) + shift)
    h = dot(fourier, w1) + b1
    h = h * jax.nn.sigmoid(h)
    return dot(h, w2) + b2


def reference_kernel_numerics(t, params):
    """Plain-JAX reference pinning the kernel's bf16-operand / f32-acc numerics."""
    fourier = jnp.cos(jnp.outer(t, params["scale"][0]) + params["shift"][0])
    h = jnp.dot(fourier.astype(jnp.bfloat16), params["w1"],
                preferred_element_type=jnp.float32) + params["b1"]
    h = h * jax.nn.sigmoid(h)
    return jnp.dot(h.astype(jnp.bfloat16), params["w2"],
                   preferred_element_type=jnp.float32) + params["b2"]


if __name__ == "__main__":
    B = 8                       # batch of timesteps
    FREQ = 256                  # frequency_embedding_size (module default)
    HIDDEN = 128                # hidden_size

    key = jax.random.PRNGKey(0)
    k_t, k_sc, k_sh, k_w1, k_b1, k_w2, k_b2 = jax.random.split(key, 7)

    # normalized diffusion timesteps in [0, 1] (keeps f32 cos range reduction
    # well conditioned; very large raw t should be pre-normalized upstream)
    t = jax.random.uniform(k_t, (B,), dtype=jnp.float32)

    # MPFourier buffers: scale = 2*pi*randn, shift = 2*pi*rand
    scale = 2.0 * jnp.pi * jax.random.normal(k_sc, (FREQ,), dtype=jnp.float32)
    shift = 2.0 * jnp.pi * jax.random.uniform(k_sh, (FREQ,), dtype=jnp.float32)

    # MLP params (deterministic synthetic init)
    w1 = jax.random.normal(k_w1, (FREQ, HIDDEN), dtype=jnp.float32) / math.sqrt(FREQ)
    b1 = jax.random.normal(k_b1, (HIDDEN,), dtype=jnp.float32) * 0.01
    w2 = jax.random.normal(k_w2, (HIDDEN, HIDDEN), dtype=jnp.float32) / math.sqrt(HIDDEN)
    b2 = jax.random.normal(k_b2, (HIDDEN,), dtype=jnp.float32) * 0.01

    params = prepare_params(scale, shift, w1, b1, w2, b2)

    out = timestep_embedder(t, params)
    out = jax.block_until_ready(out)
    assert out.shape == (B, HIDDEN)

    ref_bits = reference_kernel_numerics(t, params)   # same numerics as kernel
    ref_full = reference_f32(t, scale, shift, w1, b1, w2, b2)

    err_bits = float(jnp.max(jnp.abs(out - ref_bits)))
    err_full = float(jnp.max(jnp.abs(out - ref_full)))
    assert jnp.allclose(out, ref_bits, atol=5e-3, rtol=5e-3), \
        f"mismatch vs kernel-numerics reference (max abs err {err_bits})"
    assert jnp.allclose(out, ref_full, atol=5e-2, rtol=5e-2), \
        f"mismatch vs f32 reference (max abs err {err_full})"
    print("KERNEL_OK")
</pallas_src>

<mosaic_0001>
module attributes {stable_mosaic.version = 11 : i64} {
  func.func @timestep_embedder_kernel(%arg0: i32, %arg1: memref<8x1xf32, #tpu.memory_space<vmem>>, %arg2: memref<1x256xf32, #tpu.memory_space<vmem>>, %arg3: memref<1x256xf32, #tpu.memory_space<vmem>>, %arg4: memref<256x128xbf16, #tpu.memory_space<vmem>>, %arg5: memref<1x128xf32, #tpu.memory_space<vmem>>, %arg6: memref<128x128xbf16, #tpu.memory_space<vmem>>, %arg7: memref<1x128xf32, #tpu.memory_space<vmem>>, %arg8: memref<8x128xf32, #tpu.memory_space<vmem>>) attributes {dimension_semantics = [#tpu.dimension_semantics<parallel>], iteration_bounds = array<i64: 1>, scalar_prefetch = 0 : i64, scratch_operands = 0 : i64, tpu.core_type = #tpu.core_type<tc>, window_params = [{transform_indices = @transform_0, window_bounds = array<i64: 8, 1>}, {pipeline_mode = #tpu.pipeline_mode<synchronous>, transform_indices = @transform_1, window_bounds = array<i64: 1, 256>}, {pipeline_mode = #tpu.pipeline_mode<synchronous>, transform_indices = @transform_2, window_bounds = array<i64: 1, 256>}, {pipeline_mode = #tpu.pipeline_mode<synchronous>, transform_indices = @transform_3, window_bounds = array<i64: 256, 128>}, {pipeline_mode = #tpu.pipeline_mode<synchronous>, transform_indices = @transform_4, window_bounds = array<i64: 1, 128>}, {pipeline_mode = #tpu.pipeline_mode<synchronous>, transform_indices = @transform_5, window_bounds = array<i64: 128, 128>}, {pipeline_mode = #tpu.pipeline_mode<synchronous>, transform_indices = @transform_6, window_bounds = array<i64: 1, 128>}, {transform_indices = @transform_7, window_bounds = array<i64: 8, 128>}]} {
    %c0 = arith.constant 0 : index
    %c0_0 = arith.constant 0 : index
    %0 = vector.load %arg1[%c0, %c0_0] : memref<8x1xf32, #tpu.memory_space<vmem>>, vector<8x1xf32>
    %c0_1 = arith.constant 0 : index
    %c0_2 = arith.constant 0 : index
    %1 = vector.load %arg2[%c0_1, %c0_2] : memref<1x256xf32, #tpu.memory_space<vmem>>, vector<1x256xf32>
    %2 = vector.broadcast %0 : vector<8x1xf32> to vector<8x256xf32>
    %3 = vector.broadcast %1 : vector<1x256xf32> to vector<8x256xf32>
    %4 = arith.mulf %2, %3 : vector<8x256xf32>
    %c0_3 = arith.constant 0 : index
    %c0_4 = arith.constant 0 : index
    %5 = vector.load %arg3[%c0_3, %c0_4] : memref<1x256xf32, #tpu.memory_space<vmem>>, vector<1x256xf32>
    %6 = vector.broadcast %5 : vector<1x256xf32> to vector<8x256xf32>
    %7 = arith.addf %4, %6 : vector<8x256xf32>
    %8 = math.cos %7 : vector<8x256xf32>
    %9 = arith.truncf %8 : vector<8x256xf32> to vector<8x256xbf16>
    %c0_5 = arith.constant 0 : index
    %c0_6 = arith.constant 0 : index
    %10 = vector.load %arg4[%c0_5, %c0_6] : memref<256x128xbf16, #tpu.memory_space<vmem>>, vector<256x128xbf16>
    %cst = arith.constant dense<0.000000e+00> : vector<8x128xf32>
    %11 = tpu.matmul %9, %10, %cst {dimension_numbers = #tpu.dot_dimension_numbers<[1], [0], [0], [1], [0, 0, 1, 1], [], []>} : vector<8x256xbf16>, vector<256x128xbf16>, vector<8x128xf32> -> vector<8x128xf32>
    %c0_7 = arith.constant 0 : index
    %c0_8 = arith.constant 0 : index
    %12 = vector.load %arg5[%c0_7, %c0_8] : memref<1x128xf32, #tpu.memory_space<vmem>>, vector<1x128xf32>
    %13 = vector.broadcast %12 : vector<1x128xf32> to vector<8x128xf32>
    %14 = arith.addf %11, %13 : vector<8x128xf32>
    %15 = arith.negf %14 : vector<8x128xf32>
    %16 = math.exp %15 : vector<8x128xf32>
    %cst_9 = arith.constant 1.000000e+00 : f32
    %17 = vector.broadcast %cst_9 : f32 to vector<8x128xf32>
    %18 = arith.addf %17, %16 : vector<8x128xf32>
    %19 = arith.divf %17, %18 : vector<8x128xf32>
    %20 = arith.mulf %14, %19 : vector<8x128xf32>
    %21 = arith.truncf %20 : vector<8x128xf32> to vector<8x128xbf16>
    %c0_10 = arith.constant 0 : index
    %c0_11 = arith.constant 0 : index
    %22 = vector.load %arg6[%c0_10, %c0_11] : memref<128x128xbf16, #tpu.memory_space<vmem>>, vector<128x128xbf16>
    %cst_12 = arith.constant dense<0.000000e+00> : vector<8x128xf32>
    %23 = tpu.matmul %21, %22, %cst_12 {dimension_numbers = #tpu.dot_dimension_numbers<[1], [0], [0], [1], [0, 0, 1, 1], [], []>} : vector<8x128xbf16>, vector<128x128xbf16>, vector<8x128xf32> -> vector<8x128xf32>
    %c0_13 = arith.constant 0 : index
    %c0_14 = arith.constant 0 : index
    %24 = vector.load %arg7[%c0_13, %c0_14] : memref<1x128xf32, #tpu.memory_space<vmem>>, vector<1x128xf32>
    %25 = vector.broadcast %24 : vector<1x128xf32> to vector<8x128xf32>
    %26 = arith.addf %23, %25 : vector<8x128xf32>
    %c0_15 = arith.constant 0 : index
    %c0_16 = arith.constant 0 : index
    %27 = vector.load %arg8[%c0_15, %c0_16] : memref<8x128xf32, #tpu.memory_space<vmem>>, vector<8x128xf32>
    tpu.vector_store %arg8[%c0_15, %c0_16], %26 {strides = array<i32>} : memref<8x128xf32, #tpu.memory_space<vmem>>, vector<8x128xf32>,
    return
  }
  func.func @transform_0(%arg0: i32) -> (i32, i32) {
    %c0_i32 = arith.constant 0 : i32
    %c0_i32_0 = arith.constant 0 : i32
    return %arg0, %c0_i32 : i32, i32
  }
  func.func @transform_1(%arg0: i32) -> (i32, i32) {
    %c0_i32 = arith.constant 0 : i32
    %c0_i32_0 = arith.constant 0 : i32
    %c0_i32_1 = arith.constant 0 : i32
    return %c0_i32, %c0_i32_0 : i32, i32
  }
  func.func @transform_2(%arg0: i32) -> (i32, i32) {
    %c0_i32 = arith.constant 0 : i32
    %c0_i32_0 = arith.constant 0 : i32
    %c0_i32_1 = arith.constant 0 : i32
    return %c0_i32, %c0_i32_0 : i32, i32
  }
  func.func @transform_3(%arg0: i32) -> (i32, i32) {
    %c0_i32 = arith.constant 0 : i32
    %c0_i32_0 = arith.constant 0 : i32
    %c0_i32_1 = arith.constant 0 : i32
    return %c0_i32, %c0_i32_0 : i32, i32
  }
  func.func @transform_4(%arg0: i32) -> (i32, i32) {
    %c0_i32 = arith.constant 0 : i32
    %c0_i32_0 = arith.constant 0 : i32
    %c0_i32_1 = arith.constant 0 : i32
    return %c0_i32, %c0_i32_0 : i32, i32
  }
  func.func @transform_5(%arg0: i32) -> (i32, i32) {
    %c0_i32 = arith.constant 0 : i32
    %c0_i32_0 = arith.constant 0 : i32
    %c0_i32_1 = arith.constant 0 : i32
    return %c0_i32, %c0_i32_0 : i32, i32
  }
  func.func @transform_6(%arg0: i32) -> (i32, i32) {
    %c0_i32 = arith.constant 0 : i32
    %c0_i32_0 = arith.constant 0 : i32
    %c0_i32_1 = arith.constant 0 : i32
    return %c0_i32, %c0_i32_0 : i32, i32
  }
  func.func @transform_7(%arg0: i32) -> (i32, i32) {
    %c0_i32 = arith.constant 0 : i32
    %c0_i32_0 = arith.constant 0 : i32
    return %arg0, %c0_i32 : i32, i32
  }
}

</mosaic_0001>

<llo_original>
// kernel: timestep_embedder.1
$region0: #{timestep_embedder.1}
  #allocation0 [shape = 'u32[]', space=smem, size = 0x4, offset = 0x4, fixed_abs, tag = 'smem constant byte address 0x4 - core index']
  #allocation1 [shape = 'u32[144,128]{1,0:T(1,128)}', space=vmem, size = 0x12000, scoped, tag = 'internal scratch']
  %s0 = inlined_call_operand.vmem [shape: f32[8,1], index: 0, kind: input, shape index: {}]
  %s1 = inlined_call_operand.vmem [shape: f32[1,256], index: 1, kind: input, shape index: {}]
  %s2 = inlined_call_operand.vmem [shape: f32[1,256], index: 2, kind: input, shape index: {}]
  %s3 = inlined_call_operand.hbm [shape: bf16[256,128], index: 3, kind: input, shape index: {}]
  %s4 = inlined_call_operand.vmem [shape: f32[1,128], index: 4, kind: input, shape index: {}]
  %s5 = inlined_call_operand.hbm [shape: bf16[128,128], index: 5, kind: input, shape index: {}]
  %s6 = inlined_call_operand.vmem [shape: f32[1,128], index: 6, kind: input, shape index: {}]
  %s7 = inlined_call_operand.hbm [shape: f32[8,128], index: 7, kind: output, shape index: {}]
  %s8 = sld [smem:[#allocation0]]
  $region46: #{timestep_embedder.1} parent=0
    _
  %s10 = ssub.s32 1, %s8
  %s11 = scalar_select 0, %s10, %s8
  $region1: #{timestep_embedder.1} parent=0
    #allocation2 [shape = 'u8[65536]{0}', space=vmem, size = 0x10000, scoped, tag = 'input window, operand 3, single buffered']
    #allocation3 [shape = 's32[1]{0}', space=sflag, size = 0x4, scoped, tag = 'scoped memory for timestep_embedder.1']
    #allocation4 [shape = 's32[1]{0}', space=sflag, size = 0x4, scoped, tag = 'scoped memory for timestep_embedder.1']
    #allocation5 [shape = 'u8[32768]{0}', space=vmem, size = 0x8000, scoped, tag = 'input window, operand 5, single buffered']
    #allocation6 [shape = 's32[1]{0}', space=sflag, size = 0x4, scoped, tag = 'scoped memory for timestep_embedder.1']
    #allocation7 [shape = 'u8[4096]{0}', space=vmem, size = 0x1000, scoped, tag = 'output window, operand 0, single buffered']
    %12 = vsyncpa [#allocation3], 0
    %13 = vsyncpa [#allocation6], 0
    %14 = vsyncpa [#allocation4], 0
    // Predicated region
    $region2: #{timestep_embedder.1} parent=1 // pred_check
      _
    $region3: #{timestep_embedder.1} parent=1 // pred_check_branch
      %16 = sbr.rel (0) target = $region5
    $region4: #{timestep_embedder.1} parent=1 // pred_region
      _
    $region5: #{timestep_embedder.1} parent=1 // pred_fallthru
      _
    // Predicated region
    $region6: #{timestep_embedder.1} parent=1 // pred_check
      _
    $region7: #{timestep_embedder.1} parent=1 // pred_check_branch
      %18 = sbr.rel (0) target = $region9
    $region8: #{timestep_embedder.1} parent=1 // pred_region
      _
    $region9: #{timestep_embedder.1} parent=1 // pred_fallthru
      _
    // Predicated region
    $region10: #{timestep_embedder.1} parent=1 // pred_check
      _
    $region11: #{timestep_embedder.1} parent=1 // pred_check_branch
      %20 = sbr.rel (0) target = $region13
    $region12: #{timestep_embedder.1} parent=1 // pred_region
      _
    $region13: #{timestep_embedder.1} parent=1 // pred_fallthru
      _
    // Predicated region
    $region14: #{timestep_embedder.1} parent=1 // pred_check
      _
    $region15: #{timestep_embedder.1} parent=1 // pred_check_branch
      %22 = sbr.rel (0) target = $region17
    $region16: #{timestep_embedder.1} parent=1 // pred_region
      %s24 = ssub.s32 2048, 2048
      %25 = vsyncadd [#allocation3], %s24
      %s26 = sshll.u32 [#allocation2], 4
      %s27 = int_to_ptr.vmem [resolvable:$true] %s26
      %32 = dma.hbm_to_vmem [thread:$0]  %s3, 2048, %s27, [#allocation3], 64, 64, 4
    $region17: #{timestep_embedder.1} parent=1 // pred_fallthru
      _
    // Predicated region
    $region18: #{timestep_embedder.1} parent=1 // pred_check
      _
    $region19: #{timestep_embedder.1} parent=1 // pred_check_branch
      %34 = sbr.rel (0) target = $region21
    $region20: #{timestep_embedder.1} parent=1 // pred_region
      _
    $region21: #{timestep_embedder.1} parent=1 // pred_fallthru
      _
    // Predicated region
    $region22: #{timestep_embedder.1} parent=1 // pred_check
      _
    $region23: #{timestep_embedder.1} parent=1 // pred_check_branch
      %36 = sbr.rel (0) target = $region25
    $region24: #{timestep_embedder.1} parent=1 // pred_region
      %s38 = ssub.s32 1024, 1024
      %39 = vsyncadd [#allocation6], %s38
      %s40 = sshll.u32 [#allocation5], 4
      %s41 = int_to_ptr.vmem [resolvable:$true] %s40
      %46 = dma.hbm_to_vmem [thread:$0]  %s5, 1024, %s41, [#allocation6], 64, 64, 4
    $region25: #{timestep_embedder.1} parent=1 // pred_fallthru
      _
    // Predicated region
    $region26: #{timestep_embedder.1} parent=1 // pred_check
      _
    $region27: #{timestep_embedder.1} parent=1 // pred_check_branch
      %48 = sbr.rel (0) target = $region29
    $region28: #{timestep_embedder.1} parent=1 // pred_region
      _
    $region29: #{timestep_embedder.1} parent=1 // pred_fallthru
      _
    // Predicated region
    $region30: #{timestep_embedder.1} parent=1 // pred_check
      _
    $region31: #{timestep_embedder.1} parent=1 // pred_check_branch
      %50 = sbr.rel (0) target = $region33
    $region32: #{timestep_embedder.1} parent=1 // pred_region
      %51 = dma.done [#allocation3], 2048
    $region33: #{timestep_embedder.1} parent=1 // pred_fallthru
      _
    // Predicated region
    $region34: #{timestep_embedder.1} parent=1 // pred_check
      _
    $region35: #{timestep_embedder.1} parent=1 // pred_check_branch
      %53 = sbr.rel (0) target = $region37
    $region36: #{timestep_embedder.1} parent=1 // pred_region
      %54 = dma.done [#allocation6], 1024
    $region37: #{timestep_embedder.1} parent=1 // pred_fallthru
      _
    %v56 = vld [vmem:[%s0] sm:$0xff]
    %v57 = vld [vmem:[%s1] sm:$0x3]
    %59 = vset.pattern.permute.xlu0 0
    %60 = vperm.xlu0 %59, %v56
    %v61 = vpop.permute.xlu0 %60
    %v64 = vlaneseq
    %v65 = vshrl.u32 %v64, 7
    %v66 = vsub.s32 0, %v65
    %v67 = vrot.slane %v57, %v66
    %v68 = vlaneseq
    %v69 = vshrl.u32 %v68, 7
    %v70 = vsub.s32 1, %v69
    %v71 = vrot.slane %v57, %v70
    %v74 = vmul.f32 %v61, %v67
    %v75 = vmul.f32 %v61, %v71
    %v76 = vld [vmem:[%s2] sm:$0x3]
    %v78 = vlaneseq
    %v79 = vshrl.u32 %v78, 7
    %v80 = vsub.s32 0, %v79
    %v81 = vrot.slane %v76, %v80
    %v82 = vlaneseq
    %v83 = vshrl.u32 %v82, 7
    %v84 = vsub.s32 1, %v83
    %v85 = vrot.slane %v76, %v84
    %v88 = vadd.f32 %v74, %v81
    %v89 = vadd.f32 %v75, %v85
    %v90 = vand.u32 2147483647, %v88
    %vm91 = vcmp.le.f32.partialorder %v90, 0.7853982
    %vm92 = vcmp.lt.s32.totalorder %v88, 0
    %v93 = vand.u32 %v88, 2139095040
    %v94 = vshrl.u32 %v93, 23
    %v95 = vsub.s32 %v94, 127
    %v96 = vand.u32 2147483647, %v88
    %v97 = vand.u32 %v96, 8388607
    %v98 = vor.u32 %v97, 8388608
    %v99 = vsub.s32 0, %v98
    %v100 = vadd.s32 %v95, 1
    %vm101 = vcmp.gt.s32.totalorder %v100, 0
    %v102 = vsel %vm101, %v100, 0
    %v103 = vshrl.u32 %v102, 5
    %v104 = vand.u32 %v102, 31
    %v105 = vsub.s32 32, %v104
    %v106 = vshrl.u32 683565275, %v105
    %v107 = vshll.u32 683565275, %v104
    %v108 = vshrl.u32 2475754826, %v105
    %v109 = vor.u32 %v107, %v108
    %v110 = vshll.u32 2475754826, %v104
    %v111 = vshrl.u32 2131351028, %v105
    %v112 = vor.u32 %v110, %v111
    %v113 = vshll.u32 2131351028, %v104
    %v114 = vshrl.u32 2102212464, %v105
    %v115 = vor.u32 %v113, %v114
    %v116 = vshll.u32 2102212464, %v104
    %v117 = vshrl.u32 920167782, %v105
    %v118 = vor.u32 %v116, %v117
    %v119 = vshll.u32 920167782, %v104
    %v120 = vshrl.u32 1326507024, %v105
    %v121 = vor.u32 %v119, %v120
    %vm122 = vcmp.lt.s32.totalorder %v103, 1
    %vm123 = vcmp.lt.s32.totalorder %v103, 2
    %vm124 = vcmp.lt.s32.totalorder %v103, 3
    %vm125 = vcmp.lt.s32.totalorder %v103, 4
    %v126 = vsel %vm122, %v106, %v109
    %v127 = vsel %vm125, %v115, 2102212464
    %v128 = vsel %vm124, %v112, %v127
    %v129 = vsel %vm123, %v126, %v128
    %v130 = vsel %vm122, %v109, %v112
    %v131 = vsel %vm125, %v118, 920167782
    %v132 = vsel %vm124, %v115, %v131
    %v133 = vsel %vm123, %v130, %v132
    %v134 = vsel %vm122, %v112, %v115
    %v135 = vsel %vm125, %v121, 1326507024
    %v136 = vsel %vm124, %v118, %v135
    %v137 = vsel %vm123, %v134, %v136
    %v138 = vshll.u32 %v98, 8
    %v139 = vmul.u32.u64.compose %v138, %v137
    %v140 = vextract.low.u32 %v139
    %v141 = vextract.high.u32 %v139
    %v142 = vmul.u32.u64.compose %v138, %v133
    %v143 = vextract.low.u32 %v142
    %v144 = vextract.high.u32 %v142
    %v145 = vmul.u32 %v138, %v129
    %v146 = vadd.s32 %v141, %v143
    %vm147 = vc.u32 %v141, %v143
    %v148 = vadd.s32 %v144, 1
    %v149 = vsel %vm147, %v148, %v144
    %v150 = vadd.s32 %v145, %v149
    %v151 = vadd.s32 %v150, 536870912
    %v152 = vshrl.u32 %v151, 30
    %v153 = vshll.u32 %v152, 30
    %v154 = vsub.s32 %v150, %v153
    %vm155 = vcmp.lt.s32.totalorder %v154, 0
    %v156 = vsub.s32 0, %v154
    %v157 = vsel %vm155, %v156, %v154
    %v158 = vclz %v157
    %v159 = vsub.s32 %v158, 2
    %vm160 = vcmp.gt.s32.totalorder 0, %v159
    %v161 = vsel %vm160, 0, %v159
    %v162 = vsub.s32 32, %v161
    %v163 = vshll.u32 %v154, %v161
    %v164 = vshrl.u32 %v146, %v162
    %v165 = vor.u32 %v163, %v164
    %v166 = vsub.s32 4294967266, %v161
    %v167 = vadd.s32 %v166, 127
    %v168 = vshll.u32 %v167, 23
    %v169 = vor.u32 4788187, %v168
    %v170 = vand.u32 2147483647, %v169
    %v172 = vcvt.s32.f32 %v165
    %v173 = vmul.f32 %v172, %v170
    %v174 = vxor.u32 %v173, 2147483648
    %v175 = vsel %vm92, %v174, %v173
    %v176 = vsub.s32 4, %v152
    %v177 = vsel %vm92, %v176, %v152
    %v178 = vsel %vm91, %v88, %v175
    %v179 = vsel %vm91, 0, %v177
    %v180 = vcosq.f32.pop %v178
    %v181 = vsinq.f32.pop %v178
    %vm182 = vweird.f32 %v88
    %v183 = vand.u32 %v179, 3
    %vm184 = vcmp.lt.s32.totalorder %v183, 2
    %vm185 = vcmp.eq.s32.totalorder %v183, 0
    %v186 = vxor.u32 %v181, 2147483648
    %v187 = vsel %vm185, %v180, %v186
    %vm188 = vcmp.eq.s32.totalorder %v183, 2
    %v189 = vxor.u32 %v180, 2147483648
    %v190 = vsel %vm188, %v189, %v181
    %v191 = vsel %vm184, %v187, %v190
    %v192 = vsel %vm182, nan, %v191
    %v193 = vand.u32 2147483647, %v89
    %vm194 = vcmp.le.f32.partialorder %v193, 0.7853982
    %vm195 = vcmp.lt.s32.totalorder %v89, 0
    %v196 = vand.u32 %v89, 2139095040
    %v197 = vshrl.u32 %v196, 23
    %v198 = vsub.s32 %v197, 127
    %v199 = vand.u32 2147483647, %v89
    %v200 = vand.u32 %v199, 8388607
    %v201 = vor.u32 %v200, 8388608
    %v202 = vsub.s32 0, %v201
    %v203 = vadd.s32 %v198, 1
    %vm204 = vcmp.gt.s32.totalorder %v203, 0
    %v205 = vsel %vm204, %v203, 0
    %v206 = vshrl.u32 %v205, 5
    %v207 = vand.u32 %v205, 31
    %v208 = vsub.s32 32, %v207
    %v209 = vshrl.u32 683565275, %v208
    %v210 = vshll.u32 683565275, %v207
    %v211 = vshrl.u32 2475754826, %v208
    %v212 = vor.u32 %v210, %v211
    %v213 = vshll.u32 2475754826, %v207
    %v214 = vshrl.u32 2131351028, %v208
    %v215 = vor.u32 %v213, %v214
    %v216 = vshll.u32 2131351028, %v207
    %v217 = vshrl.u32 2102212464, %v208
    %v218 = vor.u32 %v216, %v217
    %v219 = vshll.u32 2102212464, %v207
    %v220 = vshrl.u32 920167782, %v208
    %v221 = vor.u32 %v219, %v220
    %v222 = vshll.u32 920167782, %v207
    %v223 = vshrl.u32 1326507024, %v208
    %v224 = vor.u32 %v222, %v223
    %vm225 = vcmp.lt.s32.totalorder %v206, 1
    %vm226 = vcmp.lt.s32.totalorder %v206, 2
    %vm227 = vcmp.lt.s32.totalorder %v206, 3
    %vm228 = vcmp.lt.s32.totalorder %v206, 4
    %v229 = vsel %vm225, %v209, %v212
    %v230 = vsel %vm228, %v218, 2102212464
    %v231 = vsel %vm227, %v215, %v230
    %v232 = vsel %vm226, %v229, %v231
    %v233 = vsel %vm225, %v212, %v215
    %v234 = vsel %vm228, %v221, 920167782
    %v235 = vsel %vm227, %v218, %v234
    %v236 = vsel %vm226, %v233, %v235
    %v237 = vsel %vm225, %v215, %v218
    %v238 = vsel %vm228, %v224, 1326507024
    %v239 = vsel %vm227, %v221, %v238
    %v240 = vsel %vm226, %v237, %v239
    %v241 = vshll.u32 %v201, 8
    %v242 = vmul.u32.u64.compose %v241, %v240
    %v243 = vextract.low.u32 %v242
    %v244 = vextract.high.u32 %v242
    %v245 = vmul.u32.u64.compose %v241, %v236
    %v246 = vextract.low.u32 %v245
    %v247 = vextract.high.u32 %v245
    %v248 = vmul.u32 %v241, %v232
    %v249 = vadd.s32 %v244, %v246
    %vm250 = vc.u32 %v244, %v246
    %v251 = vadd.s32 %v247, 1
    %v252 = vsel %vm250, %v251, %v247
    %v253 = vadd.s32 %v248, %v252
    %v254 = vadd.s32 %v253, 536870912
    %v255 = vshrl.u32 %v254, 30
    %v256 = vshll.u32 %v255, 30
    %v257 = vsub.s32 %v253, %v256
    %vm258 = vcmp.lt.s32.totalorder %v257, 0
    %v259 = vsub.s32 0, %v257
    %v260 = vsel %vm258, %v259, %v257
    %v261 = vclz %v260
    %v262 = vsub.s32 %v261, 2
    %vm263 = vcmp.gt.s32.totalorder 0, %v262
    %v264 = vsel %vm263, 0, %v262
    %v265 = vsub.s32 32, %v264
    %v266 = vshll.u32 %v257, %v264
    %v267 = vshrl.u32 %v249, %v265
    %v268 = vor.u32 %v266, %v267
    %v269 = vsub.s32 4294967266, %v264
    %v270 = vadd.s32 %v269, 127
    %v271 = vshll.u32 %v270, 23
    %v272 = vor.u32 4788187, %v271
    %v273 = vand.u32 2147483647, %v272
    %v275 = vcvt.s32.f32 %v268
    %v276 = vmul.f32 %v275, %v273
    %v277 = vxor.u32 %v276, 2147483648
    %v278 = vsel %vm195, %v277, %v276
    %v279 = vsub.s32 4, %v255
    %v280 = vsel %vm195, %v279, %v255
    %v281 = vsel %vm194, %v89, %v278
    %v282 = vsel %vm194, 0, %v280
    %v283 = vcosq.f32.pop %v281
    %v284 = vsinq.f32.pop %v281
    %vm285 = vweird.f32 %v89
    %v286 = vand.u32 %v282, 3
    %vm287 = vcmp.lt.s32.totalorder %v286, 2
    %vm288 = vcmp.eq.s32.totalorder %v286, 0
    %v289 = vxor.u32 %v284, 2147483648
    %v290 = vsel %vm288, %v283, %v289
    %vm291 = vcmp.eq.s32.totalorder %v286, 2
    %v292 = vxor.u32 %v283, 2147483648
    %v293 = vsel %vm291, %v292, %v284
    %v294 = vsel %vm287, %v290, %v293
    %v295 = vsel %vm285, nan, %v294
    %v296 = vpack.c.bf16 %v192, %v192
    %v297 = vpack.c.bf16 %v295, %v295
    %v298 = vld [vmem:[#allocation2] sm:$0xf]
    %v299 = vld [vmem:[#allocation2 + $0x4] sm:$0xf]
    %v300 = vld [vmem:[#allocation2 + $0x8] sm:$0xf]
    %v301 = vld [vmem:[#allocation2 + $0xc] sm:$0xf]
    %v302 = vld [vmem:[#allocation2 + $0x10] sm:$0xf]
    %v303 = vld [vmem:[#allocation2 + $0x14] sm:$0xf]
    %v304 = vld [vmem:[#allocation2 + $0x18] sm:$0xf]
    %v305 = vld [vmem:[#allocation2 + $0x1c] sm:$0xf]
    %v306 = vld [vmem:[#allocation2 + $0x20] sm:$0xf]
    %v307 = vld [vmem:[#allocation2 + $0x24] sm:$0xf]
    %v308 = vld [vmem:[#allocation2 + $0x28] sm:$0xf]
    %v309 = vld [vmem:[#allocation2 + $0x2c] sm:$0xf]
    %v310 = vld [vmem:[#allocation2 + $0x30] sm:$0xf]
    %v311 = vld [vmem:[#allocation2 + $0x34] sm:$0xf]
    %v312 = vld [vmem:[#allocation2 + $0x38] sm:$0xf]
    %v313 = vld [vmem:[#allocation2 + $0x3c] sm:$0xf]
    %v314 = vld [vmem:[#allocation2 + $0x40] sm:$0xf]
    %v315 = vld [vmem:[#allocation2 + $0x44] sm:$0xf]
    %v316 = vld [vmem:[#allocation2 + $0x48] sm:$0xf]
    %v317 = vld [vmem:[#allocation2 + $0x4c] sm:$0xf]
    %v318 = vld [vmem:[#allocation2 + $0x50] sm:$0xf]
    %v319 = vld [vmem:[#allocation2 + $0x54] sm:$0xf]
    %v320 = vld [vmem:[#allocation2 + $0x58] sm:$0xf]
    %v321 = vld [vmem:[#allocation2 + $0x5c] sm:$0xf]
    %v322 = vld [vmem:[#allocation2 + $0x60] sm:$0xf]
    %v323 = vld [vmem:[#allocation2 + $0x64] sm:$0xf]
    %v324 = vld [vmem:[#allocation2 + $0x68] sm:$0xf]
    %v325 = vld [vmem:[#allocation2 + $0x6c] sm:$0xf]
    %v326 = vld [vmem:[#allocation2 + $0x70] sm:$0xf]
    %v327 = vld [vmem:[#allocation2 + $0x74] sm:$0xf]
    %v328 = vld [vmem:[#allocation2 + $0x78] sm:$0xf]
    %v329 = vld [vmem:[#allocation2 + $0x7c] sm:$0xf]
    %v330 = vld [vmem:[%s4] sm:$0x1]
    %v332 = vlaneseq
    %v333 = vshrl.u32 %v332, 7
    %v334 = vsub.s32 0, %v333
    %v335 = vrot.slane %v330, %v334
    %v369 = vunpack.c.l.b16 %v298
    %v370 = vunpack.c.l.b16 %v299
    %v371 = vunpack.c.l.b16 %v300
    %v372 = vunpack.c.l.b16 %v301
    %v373 = vunpack.c.l.b16 %v302
    %v374 = vunpack.c.l.b16 %v303
    %v375 = vunpack.c.l.b16 %v304
    %v376 = vunpack.c.l.b16 %v305
    %v377 = vunpack.c.l.b16 %v306
    %v378 = vunpack.c.l.b16 %v307
    %v379 = vunpack.c.l.b16 %v308
    %v380 = vunpack.c.l.b16 %v309
    %v381 = vunpack.c.l.b16 %v310
    %v382 = vunpack.c.l.b16 %v311
    %v383 = vunpack.c.l.b16 %v312
    %v384 = vunpack.c.l.b16 %v313
    %v385 = vunpack.c.l.b16 %v314
    %v386 = vunpack.c.l.b16 %v315
    %v387 = vunpack.c.l.b16 %v316
    %v388 = vunpack.c.l.b16 %v317
    %v389 = vunpack.c.l.b16 %v318
    %v390 = vunpack.c.l.b16 %v319
    %v391 = vunpack.c.l.b16 %v320
    %v392 = vunpack.c.l.b16 %v321
    %v393 = vunpack.c.l.b16 %v322
    %v394 = vunpack.c.l.b16 %v323
    %v395 = vunpack.c.l.b16 %v324
    %v396 = vunpack.c.l.b16 %v325
    %v397 = vunpack.c.l.b16 %v326
    %v398 = vunpack.c.l.b16 %v327
    %v399 = vunpack.c.l.b16 %v328
    %v400 = vunpack.c.l.b16 %v329
    %v401 = vpack.c.b16 %v370, %v369
    %v402 = vpack.c.b16 %v372, %v371
    %v403 = vpack.c.b16 %v374, %v373
    %v404 = vpack.c.b16 %v376, %v375
    %v405 = vpack.c.b16 %v378, %v377
    %v406 = vpack.c.b16 %v380, %v379
    %v407 = vpack.c.b16 %v382, %v381
    %v408 = vpack.c.b16 %v384, %v383
    %v409 = vpack.c.b16 %v386, %v385
    %v410 = vpack.c.b16 %v388, %v387
    %v411 = vpack.c.b16 %v390, %v389
    %v412 = vpack.c.b16 %v392, %v391
    %v413 = vpack.c.b16 %v394, %v393
    %v414 = vpack.c.b16 %v396, %v395
    %v415 = vpack.c.b16 %v398, %v397
    %v416 = vpack.c.b16 %v400, %v399
    %433 = vmatprep.subr.bf16.mxu0 0
    %434 = vmatpush1.bf16.msra.mxu0 %v401
    %435 = vmatprep.subr.bf16.mxu0 0
    %436 = vmatpush1.bf16.msra.mxu0 %v402
    %437 = vmatprep.subr.bf16.mxu0 0
    %438 = vmatpush1.bf16.msra.mxu0 %v403
    %439 = vmatprep.subr.bf16.mxu0 0
    %440 = vmatpush1.bf16.msra.mxu0 %v404
    %441 = vmatprep.subr.bf16.mxu0 0
    %442 = vmatpush1.bf16.msra.mxu0 %v405
    %443 = vmatprep.subr.bf16.mxu0 0
    %444 = vmatpush1.bf16.msra.mxu0 %v406
    %445 = vmatprep.subr.bf16.mxu0 0
    %446 = vmatpush1.bf16.msra.mxu0 %v407
    %447 = vmatprep.subr.bf16.mxu0 0
    %448 = vmatpush1.bf16.msra.mxu0 %v408
    %449 = vmatprep.subr.bf16.mxu0 0
    %450 = vmatpush1.bf16.msra.mxu0 %v409
    %451 = vmatprep.subr.bf16.mxu0 0
    %452 = vmatpush1.bf16.msra.mxu0 %v410
    %453 = vmatprep.subr.bf16.mxu0 0
    %454 = vmatpush1.bf16.msra.mxu0 %v411
    %455 = vmatprep.subr.bf16.mxu0 0
    %456 = vmatpush1.bf16.msra.mxu0 %v412
    %457 = vmatprep.subr.bf16.mxu0 0
    %458 = vmatpush1.bf16.msra.mxu0 %v413
    %459 = vmatprep.subr.bf16.mxu0 0
    %460 = vmatpush1.bf16.msra.mxu0 %v414
    %461 = vmatprep.subr.bf16.mxu0 0
    %462 = vmatpush1.bf16.msra.mxu0 %v415
    %463 = vmatprep.subr.bf16.mxu0 0
    %464 = vmatpush1.bf16.msra.mxu0 %v416
    %465 = vmatprep.mubr.bf16.mxu0 %v297
    %466 = vmatmul.mubr.bf16.gmra.mrb[0].mxu0 %v296
    %v467 = vpop.f32.mrb[0].mxu0
    %v468 = vadd.f32 %v335, %v467
    %v469 = vpop.f32.mrb[0].mxu0
    %v470 = vpop.f32.mrb[0].mxu0
    %v471 = vpop.f32.mrb[0].mxu0
    %472 = vdwg.mxu0
    %v473 = vxor.u32 %v468, 2147483648
    %v474 = vmul.f32 %v473, 1.442695
    %v475 = vpow.pop %v474
    %v476 = vadd.f32 %v475, 1.0
    %v477 = vrcp.pop %v476
    %v478 = vmul.f32 1.0, %v477
    %v479 = vmul.f32 %v468, %v478
    %v480 = vpack.c.bf16 %v479, %v479
    %v481 = vld [vmem:[#allocation5] sm:$0xf]
    %v482 = vld [vmem:[#allocation5 + $0x4] sm:$0xf]
    %v483 = vld [vmem:[#allocation5 + $0x8] sm:$0xf]
    %v484 = vld [vmem:[#allocation5 + $0xc] sm:$0xf]
    %v485 = vld [vmem:[#allocation5 + $0x10] sm:$0xf]
    %v486 = vld [vmem:[#allocation5 + $0x14] sm:$0xf]
    %v487 = vld [vmem:[#allocation5 + $0x18] sm:$0xf]
    %v488 = vld [vmem:[#allocation5 + $0x1c] sm:$0xf]
    %v489 = vld [vmem:[#allocation5 + $0x20] sm:$0xf]
    %v490 = vld [vmem:[#allocation5 + $0x24] sm:$0xf]
    %v491 = vld [vmem:[#allocation5 + $0x28] sm:$0xf]
    %v492 = vld [vmem:[#allocation5 + $0x2c] sm:$0xf]
    %v493 = vld [vmem:[#allocation5 + $0x30] sm:$0xf]
    %v494 = vld [vmem:[#allocation5 + $0x34] sm:$0xf]
    %v495 = vld [vmem:[#allocation5 + $0x38] sm:$0xf]
    %v496 = vld [vmem:[#allocation5 + $0x3c] sm:$0xf]
    %v497 = vld [vmem:[%s6] sm:$0x1]
    %v499 = vlaneseq
    %v500 = vshrl.u32 %v499, 7
    %v501 = vsub.s32 0, %v500
    %v502 = vrot.slane %v497, %v501
    %v520 = vunpack.c.l.b16 %v481
    %v521 = vunpack.c.l.b16 %v482
    %v522 = vunpack.c.l.b16 %v483
    %v523 = vunpack.c.l.b16 %v484
    %v524 = vunpack.c.l.b16 %v485
    %v525 = vunpack.c.l.b16 %v486
    %v526 = vunpack.c.l.b16 %v487
    %v527 = vunpack.c.l.b16 %v488
    %v528 = vunpack.c.l.b16 %v489
    %v529 = vunpack.c.l.b16 %v490
    %v530 = vunpack.c.l.b16 %v491
    %v531 = vunpack.c.l.b16 %v492
    %v532 = vunpack.c.l.b16 %v493
    %v533 = vunpack.c.l.b16 %v494
    %v534 = vunpack.c.l.b16 %v495
    %v535 = vunpack.c.l.b16 %v496
    %v536 = vpack.c.b16 %v521, %v520
    %v537 = vpack.c.b16 %v523, %v522
    %v538 = vpack.c.b16 %v525, %v524
    %v539 = vpack.c.b16 %v527, %v526
    %v540 = vpack.c.b16 %v529, %v528
    %v541 = vpack.c.b16 %v531, %v530
    %v542 = vpack.c.b16 %v533, %v532
    %v543 = vpack.c.b16 %v535, %v534
    %552 = vmatprep.subr.bf16.mxu0 0
    %553 = vmatpush1.bf16.msra.mxu0 %v536
    %554 = vmatprep.subr.bf16.mxu0 0
    %555 = vmatpush1.bf16.msra.mxu0 %v537
    %556 = vmatprep.subr.bf16.mxu0 0
    %557 = vmatpush1.bf16.msra.mxu0 %v538
    %558 = vmatprep.subr.bf16.mxu0 0
    %559 = vmatpush1.bf16.msra.mxu0 %v539
    %560 = vmatprep.subr.bf16.mxu0 0
    %561 = vmatpush1.bf16.msra.mxu0 %v540
    %562 = vmatprep.subr.bf16.mxu0 0
    %563 = vmatpush1.bf16.msra.mxu0 %v541
    %564 = vmatprep.subr.bf16.mxu0 0
    %565 = vmatpush1.bf16.msra.mxu0 %v542
    %566 = vmatprep.subr.bf16.mxu0 0
    %567 = vmatpush1.bf16.msra.mxu0 %v543
    %568 = vmatprep.subr.bf16.mxu0 0
    %569 = vmatpush1.bf16.msra.mxu0 0
    %570 = vmatprep.subr.bf16.mxu0 0
    %571 = vmatpush1.bf16.msra.mxu0 0
    %572 = vmatprep.subr.bf16.mxu0 0
    %573 = vmatpush1.bf16.msra.mxu0 0
    %574 = vmatprep.subr.bf16.mxu0 0
    %575 = vmatpush1.bf16.msra.mxu0 0
    %576 = vmatprep.subr.bf16.mxu0 0
    %577 = vmatpush1.bf16.msra.mxu0 0
    %578 = vmatprep.subr.bf16.mxu0 0
    %579 = vmatpush1.bf16.msra.mxu0 0
    %580 = vmatprep.subr.bf16.mxu0 0
    %581 = vmatpush1.bf16.msra.mxu0 0
    %582 = vmatprep.subr.bf16.mxu0 0
    %583 = vmatpush1.bf16.msra.mxu0 0
    %584 = vmatprep.mubr.bf16.mxu0 0
    %585 = vmatmul.mubr.bf16.gmra.mrb[0].mxu0 %v480
    %v586 = vpop.f32.mrb[0].mxu0
    %v587 = vadd.f32 %v502, %v586
    %v588 = vpop.f32.mrb[0].mxu0
    %v589 = vpop.f32.mrb[0].mxu0
    %v590 = vpop.f32.mrb[0].mxu0
    %591 = vdwg.mxu0
    %592 = vst [vmem:[#allocation7] sm:$0xff] %v587
    // Predicated region
    $region38: #{timestep_embedder.1} parent=1 // pred_check
      _
    $region39: #{timestep_embedder.1} parent=1 // pred_check_branch
      %594 = sbr.rel (0) target = $region41
    $region40: #{timestep_embedder.1} parent=1 // pred_region
      %s596 = ssub.s32 128, 128
      %597 = vsyncadd [#allocation4], %s596
      %s599 = sshll.u32 [#allocation7], 4
      %s600 = int_to_ptr.vmem [resolvable:$true] %s599
      %602 = dma.vmem_to_hbm [thread:$0]  %s600, 128, %s7, [#allocation4]
    $region41: #{timestep_embedder.1} parent=1 // pred_fallthru
      _
    // Predicated region
    $region42: #{timestep_embedder.1} parent=1 // pred_check
      _
    $region43: #{timestep_embedder.1} parent=1 // pred_check_branch
      %604 = sbr.rel (0) target = $region45
    $region44: #{timestep_embedder.1} parent=1 // pred_region
      %605 = dma.done [#allocation4], 128
    $region45: #{timestep_embedder.1} parent=1 // pred_fallthru
      _
    %606 = vsyncpa [#allocation3], 1
    %607 = vsyncpa [#allocation6], 1
    %608 = vsyncpa [#allocation4], 1

</llo_original>
